<compile_context>
chip_gen: v6e
topology: v6e:2x2x1
jax: 0.10.0
libtpu: 0.0.40
codegen_flags: <defaults>
</compile_context>

<pallas_src>
import functools

import jax
import jax.numpy as jnp
from jax import lax
from jax.experimental import pallas as pl
from jax.experimental.pallas import tpu as pltpu


def _rnn_block_kernel(x_ref, h0_ref, wih_ref, whh_ref, bh_ref, wout_ref, bout_ref,
                      y_ref, hfinal_ref, h_carry, z_scr, hs_scr, *, batch, t_blk):
    tb = pl.program_id(0)

    @pl.when(tb == 0)
    def _():
        # seed the carried hidden state from the provided initial state
        h_carry[...] = h0_ref[...].astype(jnp.float32)

    # (1) Input projection hoisted out of the serial loop: one big
    #     [t_blk*B, D_in] x [D_in, H] MXU matmul per time block, bias folded in.
    z_scr[...] = (
        jnp.dot(x_ref[...], wih_ref[...], preferred_element_type=jnp.float32)
        + bh_ref[...].astype(jnp.float32)
    )

    # (2) Serial recurrence: only the small HxH matmul remains on the critical
    #     path. Unrolled so the LLO scheduler sees all steps.
    w_hh = whh_ref[...]

    def step(t, h):
        off = pl.multiple_of(t * batch, batch)
        pre = z_scr[pl.ds(off, batch), :] + jnp.dot(
            h, w_hh, preferred_element_type=jnp.float32)
        h_new = jnp.tanh(pre)
        hs_scr[pl.ds(off, batch), :] = h_new
        return h_new

    h_last = lax.fori_loop(0, t_blk, step, h_carry[...], unroll=True)
    h_carry[...] = h_last

    # (3) Output projection hoisted: one big [t_blk*B, H] x [H, D_out] matmul,
    #     written to a lane-dense (multiple-of-128 last dim) output block.
    y = (jnp.dot(hs_scr[...], wout_ref[...], preferred_element_type=jnp.float32)
         + bout_ref[...].astype(jnp.float32))
    y_ref[...] = y.astype(y_ref.dtype)

    @pl.when(tb == pl.num_programs(0) - 1)
    def _():
        hfinal_ref[...] = h_last.astype(hfinal_ref.dtype)


def _round_up(x, m):
    return ((x + m - 1) // m) * m


def _pick_time_block(t, max_blk=32):
    # largest divisor of T that is <= max_blk (keeps the grid exact, no T padding)
    for cand in range(min(t, max_blk), 0, -1):
        if t % cand == 0:
            return cand
    return 1


def rnn_forward_pallas(inp, h0, params, t_blk=None):
    """inp: [T, B, D_in], h0: [B, H] -> (y [T, B, D_out], h_final [B, H])."""
    w_ih, w_hh, b_h, w_out, b_out = params
    T, B, D_in = inp.shape
    H = w_hh.shape[0]
    D_out = w_out.shape[1]
    dt = inp.dtype

    # Pad lane dims to multiples of 128 and the batch (sublane) dim to 8.
    B_p = _round_up(B, 8)
    H_p = _round_up(H, 128)
    D_in_p = _round_up(D_in, 128)
    D_out_p = _round_up(D_out, 128)

    if t_blk is None:
        t_blk = _pick_time_block(T)
    n_blocks = T // t_blk
    rows_per_blk = t_blk * B_p

    # Zero-pad once in the wrapper (inert padding), flatten time-major rows.
    x_p = jnp.zeros((T, B_p, D_in_p), dt).at[:, :B, :D_in].set(inp)
    x_p = x_p.reshape(T * B_p, D_in_p)
    h0_p = jnp.zeros((B_p, H_p), dt).at[:B, :H].set(h0.astype(dt))
    wih_p = jnp.zeros((D_in_p, H_p), w_ih.dtype).at[:D_in, :H].set(w_ih)
    whh_p = jnp.zeros((H_p, H_p), w_hh.dtype).at[:H, :H].set(w_hh)
    bh_p = jnp.zeros((1, H_p), b_h.dtype).at[:, :H].set(b_h)
    wout_p = jnp.zeros((H_p, D_out_p), w_out.dtype).at[:H, :D_out].set(w_out)
    bout_p = jnp.zeros((1, D_out_p), b_out.dtype).at[:, :D_out].set(b_out)

    const2d = lambda tb: (0, 0)
    kernel = functools.partial(_rnn_block_kernel, batch=B_p, t_blk=t_blk)

    y_p, hfin_p = pl.pallas_call(
        kernel,
        out_shape=(
            jax.ShapeDtypeStruct((T * B_p, D_out_p), dt),
            jax.ShapeDtypeStruct((B_p, H_p), dt),
        ),
        grid_spec=pltpu.PrefetchScalarGridSpec(
            num_scalar_prefetch=0,
            grid=(n_blocks,),
            in_specs=[
                pl.BlockSpec((rows_per_blk, D_in_p), lambda tb: (tb, 0)),  # x block
                pl.BlockSpec((B_p, H_p), const2d),       # h0 (resident)
                pl.BlockSpec((D_in_p, H_p), const2d),    # W_ih (resident)
                pl.BlockSpec((H_p, H_p), const2d),       # W_hh (resident)
                pl.BlockSpec((1, H_p), const2d),         # b_h
                pl.BlockSpec((H_p, D_out_p), const2d),   # W_out (resident)
                pl.BlockSpec((1, D_out_p), const2d),     # b_out
            ],
            out_specs=[
                pl.BlockSpec((rows_per_blk, D_out_p), lambda tb: (tb, 0)),  # y block
                pl.BlockSpec((B_p, H_p), const2d),                          # h_final
            ],
            scratch_shapes=[
                pltpu.VMEM((B_p, H_p), jnp.float32),           # carried hidden state
                pltpu.VMEM((rows_per_blk, H_p), jnp.float32),  # Z = x@W_ih + b_h
                pltpu.VMEM((rows_per_blk, H_p), jnp.float32),  # all h_t in the block
            ],
        ),
        compiler_params=pltpu.CompilerParams(
            # The recurrence over time is serial -> "arbitrary".
            dimension_semantics=("arbitrary",),
        ),
    )(x_p, h0_p, wih_p, whh_p, bh_p, wout_p, bout_p)

    y = y_p.reshape(T, B_p, D_out_p)[:, :B, :D_out]
    h_final = hfin_p[:B, :H]
    return y, h_final


class OuterWrapperPallas:
    """JAX/Pallas analogue of OuterWrapper (two_dim=False, sequence-major input)."""

    def __init__(self, params, hidden_dim, two_dim=False):
        self.params = params
        self.hidden_dim = hidden_dim
        self.two_dim = two_dim
        self.is_logging = False

    def get_initial_state(self, batch_size):
        return jnp.zeros((batch_size, self.hidden_dim), dtype=jnp.float32)

    def __call__(self, inp, h=None, logging=False):
        if h is None:
            batch = inp.shape[0] if self.two_dim else inp.shape[1]
            h = self.get_initial_state(batch)
        self.is_logging = logging  # TODO(synk): logging hooks have no Pallas equivalent
        return rnn_forward_pallas(inp, h, self.params)


def _rnn_forward_ref(inp, h0, params):
    w_ih, w_hh, b_h, w_out, b_out = params

    def step(h, x_t):
        h_new = jnp.tanh(x_t @ w_ih + h @ w_hh + b_h[0])
        y_t = h_new @ w_out + b_out[0]
        return h_new, y_t

    h_final, ys = lax.scan(step, h0, inp)
    return ys, h_final


if __name__ == "__main__":
    T, B, D_IN, H, D_OUT = 8, 8, 32, 32, 32

    key = jax.random.PRNGKey(0)
    k1, k2, k3, k4, k5, k6 = jax.random.split(key, 6)
    params = (
        jax.random.normal(k1, (D_IN, H), jnp.float32) * 0.1,   # W_ih
        jax.random.normal(k2, (H, H), jnp.float32) * 0.1,      # W_hh
        jax.random.normal(k3, (1, H), jnp.float32) * 0.1,      # b_h
        jax.random.normal(k4, (H, D_OUT), jnp.float32) * 0.1,  # W_out
        jax.random.normal(k5, (1, D_OUT), jnp.float32) * 0.1,  # b_out
    )

    inp = jax.random.normal(k6, (T, B, D_IN), jnp.float32)

    wrapper = OuterWrapperPallas(params, hidden_dim=H, two_dim=False)

    y, h_final = wrapper(inp)              # h defaults to initial state
    y = jax.block_until_ready(y)
    h_final = jax.block_until_ready(h_final)

    # correctness check vs pure-JAX reference
    h0 = jnp.zeros((B, H), jnp.float32)
    y_ref, h_ref = _rnn_forward_ref(inp, h0, params)
    assert jnp.allclose(y, y_ref, atol=1e-4, rtol=1e-4)
    assert jnp.allclose(h_final, h_ref, atol=1e-4, rtol=1e-4)

    print("KERNEL_OK")
</pallas_src>

<mosaic_0001>
module attributes {stable_mosaic.version = 11 : i64} {
  func.func @_rnn_block_kernel(%arg0: i32, %arg1: memref<64x128xf32, #tpu.memory_space<vmem>>, %arg2: memref<8x128xf32, #tpu.memory_space<vmem>>, %arg3: memref<128x128xf32, #tpu.memory_space<vmem>>, %arg4: memref<128x128xf32, #tpu.memory_space<vmem>>, %arg5: memref<1x128xf32, #tpu.memory_space<vmem>>, %arg6: memref<128x128xf32, #tpu.memory_space<vmem>>, %arg7: memref<1x128xf32, #tpu.memory_space<vmem>>, %arg8: memref<64x128xf32, #tpu.memory_space<vmem>>, %arg9: memref<8x128xf32, #tpu.memory_space<vmem>>, %arg10: memref<8x128xf32, #tpu.memory_space<vmem>>, %arg11: memref<64x128xf32, #tpu.memory_space<vmem>>, %arg12: memref<64x128xf32, #tpu.memory_space<vmem>>) attributes {dimension_semantics = [#tpu.dimension_semantics<arbitrary>], iteration_bounds = array<i64: 1>, scalar_prefetch = 0 : i64, scratch_operands = 3 : i64, tpu.core_type = #tpu.core_type<tc>, window_params = [{transform_indices = @transform_0, window_bounds = array<i64: 64, 128>}, {pipeline_mode = #tpu.pipeline_mode<synchronous>, transform_indices = @transform_1, window_bounds = array<i64: 8, 128>}, {pipeline_mode = #tpu.pipeline_mode<synchronous>, transform_indices = @transform_2, window_bounds = array<i64: 128, 128>}, {pipeline_mode = #tpu.pipeline_mode<synchronous>, transform_indices = @transform_3, window_bounds = array<i64: 128, 128>}, {pipeline_mode = #tpu.pipeline_mode<synchronous>, transform_indices = @transform_4, window_bounds = array<i64: 1, 128>}, {pipeline_mode = #tpu.pipeline_mode<synchronous>, transform_indices = @transform_5, window_bounds = array<i64: 128, 128>}, {pipeline_mode = #tpu.pipeline_mode<synchronous>, transform_indices = @transform_6, window_bounds = array<i64: 1, 128>}, {transform_indices = @transform_7, window_bounds = array<i64: 64, 128>}, {pipeline_mode = #tpu.pipeline_mode<synchronous>, transform_indices = @transform_8, window_bounds = array<i64: 8, 128>}]} {
    %c0_i32 = arith.constant 0 : i32
    %0 = arith.cmpi eq, %arg0, %c0_i32 : i32
    %1 = arith.extui %0 : i1 to i32
    %c0_i32_0 = arith.constant 0 : i32
    %2 = arith.cmpi ne, %1, %c0_i32_0 : i32
    scf.if %2 {
      %c0_58 = arith.constant 0 : index
      %c0_59 = arith.constant 0 : index
      %95 = vector.load %arg2[%c0_58, %c0_59] : memref<8x128xf32, #tpu.memory_space<vmem>>, vector<8x128xf32>
      %c0_60 = arith.constant 0 : index
      %c0_61 = arith.constant 0 : index
      %96 = vector.load %arg10[%c0_60, %c0_61] : memref<8x128xf32, #tpu.memory_space<vmem>>, vector<8x128xf32>
      tpu.vector_store %arg10[%c0_60, %c0_61], %95 {strides = array<i32>} : memref<8x128xf32, #tpu.memory_space<vmem>>, vector<8x128xf32>,
    } else {
    }
    %c0 = arith.constant 0 : index
    %c0_1 = arith.constant 0 : index
    %3 = vector.load %arg1[%c0, %c0_1] : memref<64x128xf32, #tpu.memory_space<vmem>>, vector<64x128xf32>
    %c0_2 = arith.constant 0 : index
    %c0_3 = arith.constant 0 : index
    %4 = vector.load %arg3[%c0_2, %c0_3] : memref<128x128xf32, #tpu.memory_space<vmem>>, vector<128x128xf32>
    %cst = arith.constant dense<0.000000e+00> : vector<64x128xf32>
    %5 = tpu.matmul %3, %4, %cst {dimension_numbers = #tpu.dot_dimension_numbers<[1], [0], [0], [1], [0, 0, 1, 1], [], []>} : vector<64x128xf32>, vector<128x128xf32>, vector<64x128xf32> -> vector<64x128xf32>
    %c0_4 = arith.constant 0 : index
    %c0_5 = arith.constant 0 : index
    %6 = vector.load %arg5[%c0_4, %c0_5] : memref<1x128xf32, #tpu.memory_space<vmem>>, vector<1x128xf32>
    %7 = vector.broadcast %6 : vector<1x128xf32> to vector<64x128xf32>
    %8 = arith.addf %5, %7 : vector<64x128xf32>
    %c0_6 = arith.constant 0 : index
    %c0_7 = arith.constant 0 : index
    %9 = vector.load %arg11[%c0_6, %c0_7] : memref<64x128xf32, #tpu.memory_space<vmem>>, vector<64x128xf32>
    tpu.vector_store %arg11[%c0_6, %c0_7], %8 {strides = array<i32>} : memref<64x128xf32, #tpu.memory_space<vmem>>, vector<64x128xf32>,
    %c0_8 = arith.constant 0 : index
    %c0_9 = arith.constant 0 : index
    %10 = vector.load %arg4[%c0_8, %c0_9] : memref<128x128xf32, #tpu.memory_space<vmem>>, vector<128x128xf32>
    %c0_10 = arith.constant 0 : index
    %c0_11 = arith.constant 0 : index
    %11 = vector.load %arg10[%c0_10, %c0_11] : memref<8x128xf32, #tpu.memory_space<vmem>>, vector<8x128xf32>
    %c0_i32_12 = arith.constant 0 : i32
    %c8_i32 = arith.constant 8 : i32
    %12 = arith.muli %c0_i32_12, %c8_i32 : i32
    %13 = tpu.assume_multiple %12, 8 : i32
    %14 = arith.index_cast %13 : i32 to index
    %c0_13 = arith.constant 0 : index
    %15 = vector.load %arg11[%14, %c0_13] : memref<64x128xf32, #tpu.memory_space<vmem>>, vector<8x128xf32>
    %cst_14 = arith.constant dense<0.000000e+00> : vector<8x128xf32>
    %16 = tpu.matmul %11, %10, %cst_14 {dimension_numbers = #tpu.dot_dimension_numbers<[1], [0], [0], [1], [0, 0, 1, 1], [], []>} : vector<8x128xf32>, vector<128x128xf32>, vector<8x128xf32> -> vector<8x128xf32>
    %17 = arith.addf %15, %16 : vector<8x128xf32>
    %18 = math.tanh %17 : vector<8x128xf32>
    %19 = arith.index_cast %13 : i32 to index
    %c0_15 = arith.constant 0 : index
    %20 = vector.load %arg12[%19, %c0_15] : memref<64x128xf32, #tpu.memory_space<vmem>>, vector<8x128xf32>
    tpu.vector_store %arg12[%19, %c0_15], %18 {strides = array<i32>} : memref<64x128xf32, #tpu.memory_space<vmem>>, vector<8x128xf32>,
    %c1_i32 = arith.constant 1 : i32
    %c8_i32_16 = arith.constant 8 : i32
    %21 = arith.muli %c1_i32, %c8_i32_16 : i32
    %22 = tpu.assume_multiple %21, 8 : i32
    %23 = arith.index_cast %22 : i32 to index
    %c0_17 = arith.constant 0 : index
    %24 = vector.load %arg11[%23, %c0_17] : memref<64x128xf32, #tpu.memory_space<vmem>>, vector<8x128xf32>
    %cst_18 = arith.constant dense<0.000000e+00> : vector<8x128xf32>
    %25 = tpu.matmul %18, %10, %cst_18 {dimension_numbers = #tpu.dot_dimension_numbers<[1], [0], [0], [1], [0, 0, 1, 1], [], []>} : vector<8x128xf32>, vector<128x128xf32>, vector<8x128xf32> -> vector<8x128xf32>
    %26 = arith.addf %24, %25 : vector<8x128xf32>
    %27 = math.tanh %26 : vector<8x128xf32>
    %28 = arith.index_cast %22 : i32 to index
    %c0_19 = arith.constant 0 : index
    %29 = vector.load %arg12[%28, %c0_19] : memref<64x128xf32, #tpu.memory_space<vmem>>, vector<8x128xf32>
    tpu.vector_store %arg12[%28, %c0_19], %27 {strides = array<i32>} : memref<64x128xf32, #tpu.memory_space<vmem>>, vector<8x128xf32>,
    %c2_i32 = arith.constant 2 : i32
    %c8_i32_20 = arith.constant 8 : i32
    %30 = arith.muli %c2_i32, %c8_i32_20 : i32
    %31 = tpu.assume_multiple %30, 8 : i32
    %32 = arith.index_cast %31 : i32 to index
    %c0_21 = arith.constant 0 : index
    %33 = vector.load %arg11[%32, %c0_21] : memref<64x128xf32, #tpu.memory_space<vmem>>, vector<8x128xf32>
    %cst_22 = arith.constant dense<0.000000e+00> : vector<8x128xf32>
    %34 = tpu.matmul %27, %10, %cst_22 {dimension_numbers = #tpu.dot_dimension_numbers<[1], [0], [0], [1], [0, 0, 1, 1], [], []>} : vector<8x128xf32>, vector<128x128xf32>, vector<8x128xf32> -> vector<8x128xf32>
    %35 = arith.addf %33, %34 : vector<8x128xf32>
    %36 = math.tanh %35 : vector<8x128xf32>
    %37 = arith.index_cast %31 : i32 to index
    %c0_23 = arith.constant 0 : index
    %38 = vector.load %arg12[%37, %c0_23] : memref<64x128xf32, #tpu.memory_space<vmem>>, vector<8x128xf32>
    tpu.vector_store %arg12[%37, %c0_23], %36 {strides = array<i32>} : memref<64x128xf32, #tpu.memory_space<vmem>>, vector<8x128xf32>,
    %c3_i32 = arith.constant 3 : i32
    %c8_i32_24 = arith.constant 8 : i32
    %39 = arith.muli %c3_i32, %c8_i32_24 : i32
    %40 = tpu.assume_multiple %39, 8 : i32
    %41 = arith.index_cast %40 : i32 to index
    %c0_25 = arith.constant 0 : index
    %42 = vector.load %arg11[%41, %c0_25] : memref<64x128xf32, #tpu.memory_space<vmem>>, vector<8x128xf32>
    %cst_26 = arith.constant dense<0.000000e+00> : vector<8x128xf32>
    %43 = tpu.matmul %36, %10, %cst_26 {dimension_numbers = #tpu.dot_dimension_numbers<[1], [0], [0], [1], [0, 0, 1, 1], [], []>} : vector<8x128xf32>, vector<128x128xf32>, vector<8x128xf32> -> vector<8x128xf32>
    %44 = arith.addf %42, %43 : vector<8x128xf32>
    %45 = math.tanh %44 : vector<8x128xf32>
    %46 = arith.index_cast %40 : i32 to index
    %c0_27 = arith.constant 0 : index
    %47 = vector.load %arg12[%46, %c0_27] : memref<64x128xf32, #tpu.memory_space<vmem>>, vector<8x128xf32>
    tpu.vector_store %arg12[%46, %c0_27], %45 {strides = array<i32>} : memref<64x128xf32, #tpu.memory_space<vmem>>, vector<8x128xf32>,
    %c4_i32 = arith.constant 4 : i32
    %c8_i32_28 = arith.constant 8 : i32
    %48 = arith.muli %c4_i32, %c8_i32_28 : i32
    %49 = tpu.assume_multiple %48, 8 : i32
    %50 = arith.index_cast %49 : i32 to index
    %c0_29 = arith.constant 0 : index
    %51 = vector.load %arg11[%50, %c0_29] : memref<64x128xf32, #tpu.memory_space<vmem>>, vector<8x128xf32>
    %cst_30 = arith.constant dense<0.000000e+00> : vector<8x128xf32>
    %52 = tpu.matmul %45, %10, %cst_30 {dimension_numbers = #tpu.dot_dimension_numbers<[1], [0], [0], [1], [0, 0, 1, 1], [], []>} : vector<8x128xf32>, vector<128x128xf32>, vector<8x128xf32> -> vector<8x128xf32>
    %53 = arith.addf %51, %52 : vector<8x128xf32>
    %54 = math.tanh %53 : vector<8x128xf32>
    %55 = arith.index_cast %49 : i32 to index
    %c0_31 = arith.constant 0 : index
    %56 = vector.load %arg12[%55, %c0_31] : memref<64x128xf32, #tpu.memory_space<vmem>>, vector<8x128xf32>
    tpu.vector_store %arg12[%55, %c0_31], %54 {strides = array<i32>} : memref<64x128xf32, #tpu.memory_space<vmem>>, vector<8x128xf32>,
    %c5_i32 = arith.constant 5 : i32
    %c8_i32_32 = arith.constant 8 : i32
    %57 = arith.muli %c5_i32, %c8_i32_32 : i32
    %58 = tpu.assume_multiple %57, 8 : i32
    %59 = arith.index_cast %58 : i32 to index
    %c0_33 = arith.constant 0 : index
    %60 = vector.load %arg11[%59, %c0_33] : memref<64x128xf32, #tpu.memory_space<vmem>>, vector<8x128xf32>
    %cst_34 = arith.constant dense<0.000000e+00> : vector<8x128xf32>
    %61 = tpu.matmul %54, %10, %cst_34 {dimension_numbers = #tpu.dot_dimension_numbers<[1], [0], [0], [1], [0, 0, 1, 1], [], []>} : vector<8x128xf32>, vector<128x128xf32>, vector<8x128xf32> -> vector<8x128xf32>
    %62 = arith.addf %60, %61 : vector<8x128xf32>
    %63 = math.tanh %62 : vector<8x128xf32>
    %64 = arith.index_cast %58 : i32 to index
    %c0_35 = arith.constant 0 : index
    %65 = vector.load %arg12[%64, %c0_35] : memref<64x128xf32, #tpu.memory_space<vmem>>, vector<8x128xf32>
    tpu.vector_store %arg12[%64, %c0_35], %63 {strides = array<i32>} : memref<64x128xf32, #tpu.memory_space<vmem>>, vector<8x128xf32>,
    %c6_i32 = arith.constant 6 : i32
    %c8_i32_36 = arith.constant 8 : i32
    %66 = arith.muli %c6_i32, %c8_i32_36 : i32
    %67 = tpu.assume_multiple %66, 8 : i32
    %68 = arith.index_cast %67 : i32 to index
    %c0_37 = arith.constant 0 : index
    %69 = vector.load %arg11[%68, %c0_37] : memref<64x128xf32, #tpu.memory_space<vmem>>, vector<8x128xf32>
    %cst_38 = arith.constant dense<0.000000e+00> : vector<8x128xf32>
    %70 = tpu.matmul %63, %10, %cst_38 {dimension_numbers = #tpu.dot_dimension_numbers<[1], [0], [0], [1], [0, 0, 1, 1], [], []>} : vector<8x128xf32>, vector<128x128xf32>, vector<8x128xf32> -> vector<8x128xf32>
    %71 = arith.addf %69, %70 : vector<8x128xf32>
    %72 = math.tanh %71 : vector<8x128xf32>
    %73 = arith.index_cast %67 : i32 to index
    %c0_39 = arith.constant 0 : index
    %74 = vector.load %arg12[%73, %c0_39] : memref<64x128xf32, #tpu.memory_space<vmem>>, vector<8x128xf32>
    tpu.vector_store %arg12[%73, %c0_39], %72 {strides = array<i32>} : memref<64x128xf32, #tpu.memory_space<vmem>>, vector<8x128xf32>,
    %c7_i32 = arith.constant 7 : i32
    %c8_i32_40 = arith.constant 8 : i32
    %75 = arith.muli %c7_i32, %c8_i32_40 : i32
    %76 = tpu.assume_multiple %75, 8 : i32
    %77 = arith.index_cast %76 : i32 to index
    %c0_41 = arith.constant 0 : index
    %78 = vector.load %arg11[%77, %c0_41] : memref<64x128xf32, #tpu.memory_space<vmem>>, vector<8x128xf32>
    %cst_42 = arith.constant dense<0.000000e+00> : vector<8x128xf32>
    %79 = tpu.matmul %72, %10, %cst_42 {dimension_numbers = #tpu.dot_dimension_numbers<[1], [0], [0], [1], [0, 0, 1, 1], [], []>} : vector<8x128xf32>, vector<128x128xf32>, vector<8x128xf32> -> vector<8x128xf32>
    %80 = arith.addf %78, %79 : vector<8x128xf32>
    %81 = math.tanh %80 : vector<8x128xf32>
    %82 = arith.index_cast %76 : i32 to index
    %c0_43 = arith.constant 0 : index
    %83 = vector.load %arg12[%82, %c0_43] : memref<64x128xf32, #tpu.memory_space<vmem>>, vector<8x128xf32>
    tpu.vector_store %arg12[%82, %c0_43], %81 {strides = array<i32>} : memref<64x128xf32, #tpu.memory_space<vmem>>, vector<8x128xf32>,
    %c8_i32_44 = arith.constant 8 : i32
    %c0_45 = arith.constant 0 : index
    %c0_46 = arith.constant 0 : index
    %84 = vector.load %arg10[%c0_45, %c0_46] : memref<8x128xf32, #tpu.memory_space<vmem>>, vector<8x128xf32>
    tpu.vector_store %arg10[%c0_45, %c0_46], %81 {strides = array<i32>} : memref<8x128xf32, #tpu.memory_space<vmem>>, vector<8x128xf32>,
    %c0_47 = arith.constant 0 : index
    %c0_48 = arith.constant 0 : index
    %85 = vector.load %arg12[%c0_47, %c0_48] : memref<64x128xf32, #tpu.memory_space<vmem>>, vector<64x128xf32>
    %c0_49 = arith.constant 0 : index
    %c0_50 = arith.constant 0 : index
    %86 = vector.load %arg6[%c0_49, %c0_50] : memref<128x128xf32, #tpu.memory_space<vmem>>, vector<128x128xf32>
    %cst_51 = arith.constant dense<0.000000e+00> : vector<64x128xf32>
    %87 = tpu.matmul %85, %86, %cst_51 {dimension_numbers = #tpu.dot_dimension_numbers<[1], [0], [0], [1], [0, 0, 1, 1], [], []>} : vector<64x128xf32>, vector<128x128xf32>, vector<64x128xf32> -> vector<64x128xf32>
    %c0_52 = arith.constant 0 : index
    %c0_53 = arith.constant 0 : index
    %88 = vector.load %arg7[%c0_52, %c0_53] : memref<1x128xf32, #tpu.memory_space<vmem>>, vector<1x128xf32>
    %89 = vector.broadcast %88 : vector<1x128xf32> to vector<64x128xf32>
    %90 = arith.addf %87, %89 : vector<64x128xf32>
    %c0_54 = arith.constant 0 : index
    %c0_55 = arith.constant 0 : index
    %91 = vector.load %arg8[%c0_54, %c0_55] : memref<64x128xf32, #tpu.memory_space<vmem>>, vector<64x128xf32>
    tpu.vector_store %arg8[%c0_54, %c0_55], %90 {strides = array<i32>} : memref<64x128xf32, #tpu.memory_space<vmem>>, vector<64x128xf32>,
    %c0_i32_56 = arith.constant 0 : i32
    %92 = arith.cmpi eq, %arg0, %c0_i32_56 : i32
    %93 = arith.extui %92 : i1 to i32
    %c0_i32_57 = arith.constant 0 : i32
    %94 = arith.cmpi ne, %93, %c0_i32_57 : i32
    scf.if %94 {
      %c0_58 = arith.constant 0 : index
      %c0_59 = arith.constant 0 : index
      %95 = vector.load %arg9[%c0_58, %c0_59] : memref<8x128xf32, #tpu.memory_space<vmem>>, vector<8x128xf32>
      tpu.vector_store %arg9[%c0_58, %c0_59], %81 {strides = array<i32>} : memref<8x128xf32, #tpu.memory_space<vmem>>, vector<8x128xf32>,
    } else {
    }
    return
  }
  func.func @transform_0(%arg0: i32) -> (i32, i32) {
    %c0_i32 = arith.constant 0 : i32
    %c0_i32_0 = arith.constant 0 : i32
    return %arg0, %c0_i32 : i32, i32
  }
  func.func @transform_1(%arg0: i32) -> (i32, i32) {
    %c0_i32 = arith.constant 0 : i32
    %c0_i32_0 = arith.constant 0 : i32
    %c0_i32_1 = arith.constant 0 : i32
    return %c0_i32, %c0_i32_0 : i32, i32
  }
  func.func @transform_2(%arg0: i32) -> (i32, i32) {
    %c0_i32 = arith.constant 0 : i32
    %c0_i32_0 = arith.constant 0 : i32
    %c0_i32_1 = arith.constant 0 : i32
    return %c0_i32, %c0_i32_0 : i32, i32
  }
  func.func @transform_3(%arg0: i32) -> (i32, i32) {
    %c0_i32 = arith.constant 0 : i32
    %c0_i32_0 = arith.constant 0 : i32
    %c0_i32_1 = arith.constant 0 : i32
    return %c0_i32, %c0_i32_0 : i32, i32
  }
  func.func @transform_4(%arg0: i32) -> (i32, i32) {
    %c0_i32 = arith.constant 0 : i32
    %c0_i32_0 = arith.constant 0 : i32
    %c0_i32_1 = arith.constant 0 : i32
    return %c0_i32, %c0_i32_0 : i32, i32
  }
  func.func @transform_5(%arg0: i32) -> (i32, i32) {
    %c0_i32 = arith.constant 0 : i32
    %c0_i32_0 = arith.constant 0 : i32
    %c0_i32_1 = arith.constant 0 : i32
    return %c0_i32, %c0_i32_0 : i32, i32
  }
  func.func @transform_6(%arg0: i32) -> (i32, i32) {
    %c0_i32 = arith.constant 0 : i32
    %c0_i32_0 = arith.constant 0 : i32
    %c0_i32_1 = arith.constant 0 : i32
    return %c0_i32, %c0_i32_0 : i32, i32
  }
  func.func @transform_7(%arg0: i32) -> (i32, i32) {
    %c0_i32 = arith.constant 0 : i32
    %c0_i32_0 = arith.constant 0 : i32
    return %arg0, %c0_i32 : i32, i32
  }
  func.func @transform_8(%arg0: i32) -> (i32, i32) {
    %c0_i32 = arith.constant 0 : i32
    %c0_i32_0 = arith.constant 0 : i32
    %c0_i32_1 = arith.constant 0 : i32
    return %c0_i32, %c0_i32_0 : i32, i32
  }
}

</mosaic_0001>

<llo_original>
// kernel: tpu_custom_call.1
$region0: #{tpu_custom_call.1}
  #allocation0 [shape = 'u32[]', space=smem, size = 0x4, offset = 0x4, fixed_abs, tag = 'smem constant byte address 0x4 - core index']
  #allocation1 [shape = 'u32[144,128]{1,0:T(1,128)}', space=vmem, size = 0x12000, scoped, tag = 'internal scratch']
  #allocation2 [shape = 'f32[8,128]{1,0:T(8,128)}', space=vmem, size = 0x1000, scoped, tag = 'scratch operand']
  #allocation3 [shape = 'f32[64,128]{1,0:T(8,128)}', space=vmem, size = 0x8000, scoped, tag = 'scratch operand']
  #allocation4 [shape = 'f32[64,128]{1,0:T(8,128)}', space=vmem, size = 0x8000, scoped, tag = 'scratch operand']
  %s0 = inlined_call_operand.hbm [shape: f32[64,128], index: 0, kind: input, shape index: {}]
  %s1 = inlined_call_operand.hbm [shape: f32[8,128], index: 1, kind: input, shape index: {}]
  %s2 = inlined_call_operand.hbm [shape: f32[128,128], index: 2, kind: input, shape index: {}]
  %s3 = inlined_call_operand.hbm [shape: f32[128,128], index: 3, kind: input, shape index: {}]
  %s4 = inlined_call_operand.vmem [shape: f32[1,128], index: 4, kind: input, shape index: {}]
  %s5 = inlined_call_operand.hbm [shape: f32[128,128], index: 5, kind: input, shape index: {}]
  %s6 = inlined_call_operand.vmem [shape: f32[1,128], index: 6, kind: input, shape index: {}]
  %s7 = inlined_call_operand.hbm [shape: f32[64,128], index: 7, kind: output, shape index: {0}]
  %s8 = inlined_call_operand.hbm [shape: f32[8,128], index: 8, kind: output, shape index: {1}]
  %9 = xla_tuple %s7, %s8
  %s10 = sld [smem:[#allocation0]]
  $region74: #{tpu_custom_call.1} parent=0
    _
  %s12 = ssub.s32 1, %s10
  %s13 = scalar_select 0, %s12, %s10
  $region1: #{tpu_custom_call.1} parent=0
    #allocation5 [shape = 'u8[32768]{0}', space=vmem, size = 0x8000, scoped, tag = 'input window, operand 0, single buffered']
    #allocation6 [shape = 's32[1]{0}', space=sflag, size = 0x4, scoped, tag = 'scoped memory for tpu_custom_call.1']
    #allocation7 [shape = 's32[1]{0}', space=sflag, size = 0x4, scoped, tag = 'scoped memory for tpu_custom_call.1']
    #allocation8 [shape = 'u8[4096]{0}', space=vmem, size = 0x1000, scoped, tag = 'input window, operand 1, single buffered']
    #allocation9 [shape = 's32[1]{0}', space=sflag, size = 0x4, scoped, tag = 'scoped memory for tpu_custom_call.1']
    #allocation10 [shape = 'u8[65536]{0}', space=vmem, size = 0x10000, scoped, tag = 'input window, operand 2, single buffered']
    #allocation11 [shape = 'u8[65536]{0}', space=vmem, size = 0x10000, scoped, tag = 'input window, operand 3, single buffered']
    #allocation12 [shape = 's32[1]{0}', space=sflag, size = 0x4, scoped, tag = 'scoped memory for tpu_custom_call.1']
    #allocation13 [shape = 'u8[65536]{0}', space=vmem, size = 0x10000, scoped, tag = 'input window, operand 5, single buffered']
    #allocation14 [shape = 'u8[32768]{0}', space=vmem, size = 0x8000, scoped, tag = 'output window, operand 0, single buffered']
    #allocation15 [shape = 'u8[4096]{0}', space=vmem, size = 0x1000, scoped, tag = 'output window, operand 1, single buffered']
    #allocation16 [shape = 's32[1]{0}', space=sflag, size = 0x4, scoped, tag = 'scoped memory for tpu_custom_call.1']
    %14 = vsyncpa [#allocation6], 0
    %15 = vsyncpa [#allocation9], 0
    %16 = vsyncpa [#allocation12], 0
    %17 = vsyncpa [#allocation7], 0
    %18 = vsyncpa [#allocation16], 0
    // Predicated region
    $region2: #{tpu_custom_call.1} parent=1 // pred_check
      _
    $region3: #{tpu_custom_call.1} parent=1 // pred_check_branch
      %20 = sbr.rel (0) target = $region5
    $region4: #{tpu_custom_call.1} parent=1 // pred_region
      %s22 = ssub.s32 1024, 1024
      %23 = vsyncadd [#allocation6], %s22
      %s24 = sshll.u32 [#allocation5], 4
      %s25 = int_to_ptr.vmem [resolvable:$true] %s24
      %30 = dma.hbm_to_vmem [thread:$0]  %s0, 1024, %s25, [#allocation6], 128, 128, 8
    $region5: #{tpu_custom_call.1} parent=1 // pred_fallthru
      _
    // Predicated region
    $region6: #{tpu_custom_call.1} parent=1 // pred_check
      _
    $region7: #{tpu_custom_call.1} parent=1 // pred_check_branch
      %32 = sbr.rel (0) target = $region9
    $region8: #{tpu_custom_call.1} parent=1 // pred_region
      %s34 = ssub.s32 128, 128
      %35 = vsyncadd [#allocation9], %s34
      %s37 = sshll.u32 [#allocation8], 4
      %s38 = int_to_ptr.vmem [resolvable:$true] %s37
      %40 = dma.hbm_to_vmem [thread:$0]  %s1, 128, %s38, [#allocation9]
    $region9: #{tpu_custom_call.1} parent=1 // pred_fallthru
      _
    // Predicated region
    $region10: #{tpu_custom_call.1} parent=1 // pred_check
      _
    $region11: #{tpu_custom_call.1} parent=1 // pred_check_branch
      %42 = sbr.rel (0) target = $region13
    $region12: #{tpu_custom_call.1} parent=1 // pred_region
      %s44 = ssub.s32 2048, 2048
      %45 = vsyncadd [#allocation9], %s44
      %s46 = sshll.u32 [#allocation10], 4
      %s47 = int_to_ptr.vmem [resolvable:$true] %s46
      %52 = dma.hbm_to_vmem [thread:$0]  %s2, 2048, %s47, [#allocation9], 128, 128, 8
    $region13: #{tpu_custom_call.1} parent=1 // pred_fallthru
      _
    // Predicated region
    $region14: #{tpu_custom_call.1} parent=1 // pred_check
      _
    $region15: #{tpu_custom_call.1} parent=1 // pred_check_branch
      %54 = sbr.rel (0) target = $region17
    $region16: #{tpu_custom_call.1} parent=1 // pred_region
      %s56 = ssub.s32 2048, 2048
      %57 = vsyncadd [#allocation12], %s56
      %s58 = sshll.u32 [#allocation11], 4
      %s59 = int_to_ptr.vmem [resolvable:$true] %s58
      %64 = dma.hbm_to_vmem [thread:$0]  %s3, 2048, %s59, [#allocation12], 128, 128, 8
    $region17: #{tpu_custom_call.1} parent=1 // pred_fallthru
      _
    // Predicated region
    $region18: #{tpu_custom_call.1} parent=1 // pred_check
      _
    $region19: #{tpu_custom_call.1} parent=1 // pred_check_branch
      %66 = sbr.rel (0) target = $region21
    $region20: #{tpu_custom_call.1} parent=1 // pred_region
      _
    $region21: #{tpu_custom_call.1} parent=1 // pred_fallthru
      _
    // Predicated region
    $region22: #{tpu_custom_call.1} parent=1 // pred_check
      _
    $region23: #{tpu_custom_call.1} parent=1 // pred_check_branch
      %68 = sbr.rel (0) target = $region25
    $region24: #{tpu_custom_call.1} parent=1 // pred_region
      %s70 = ssub.s32 2048, 2048
      %71 = vsyncadd [#allocation12], %s70
      %s72 = sshll.u32 [#allocation13], 4
      %s73 = int_to_ptr.vmem [resolvable:$true] %s72
      %78 = dma.hbm_to_vmem [thread:$0]  %s5, 2048, %s73, [#allocation12], 128, 128, 8
    $region25: #{tpu_custom_call.1} parent=1 // pred_fallthru
      _
    // Predicated region
    $region26: #{tpu_custom_call.1} parent=1 // pred_check
      _
    $region27: #{tpu_custom_call.1} parent=1 // pred_check_branch
      %80 = sbr.rel (0) target = $region29
    $region28: #{tpu_custom_call.1} parent=1 // pred_region
      _
    $region29: #{tpu_custom_call.1} parent=1 // pred_fallthru
      _
    // Predicated region
    $region30: #{tpu_custom_call.1} parent=1 // pred_check
      _
    $region31: #{tpu_custom_call.1} parent=1 // pred_check_branch
      %82 = sbr.rel (0) target = $region33
    $region32: #{tpu_custom_call.1} parent=1 // pred_region
      %83 = dma.done [#allocation6], 1024
    $region33: #{tpu_custom_call.1} parent=1 // pred_fallthru
      _
    // Predicated region
    $region34: #{tpu_custom_call.1} parent=1 // pred_check
      _
    $region35: #{tpu_custom_call.1} parent=1 // pred_check_branch
      %85 = sbr.rel (0) target = $region37
    $region36: #{tpu_custom_call.1} parent=1 // pred_region
      %86 = dma.done [#allocation9], 128
    $region37: #{tpu_custom_call.1} parent=1 // pred_fallthru
      _
    // Predicated region
    $region38: #{tpu_custom_call.1} parent=1 // pred_check
      _
    $region39: #{tpu_custom_call.1} parent=1 // pred_check_branch
      %88 = sbr.rel (0) target = $region41
    $region40: #{tpu_custom_call.1} parent=1 // pred_region
      %89 = dma.done [#allocation9], 2048
    $region41: #{tpu_custom_call.1} parent=1 // pred_fallthru
      _
    // Predicated region
    $region42: #{tpu_custom_call.1} parent=1 // pred_check
      _
    $region43: #{tpu_custom_call.1} parent=1 // pred_check_branch
      %91 = sbr.rel (0) target = $region45
    $region44: #{tpu_custom_call.1} parent=1 // pred_region
      %92 = dma.done [#allocation12], 2048
    $region45: #{tpu_custom_call.1} parent=1 // pred_fallthru
      _
    // Predicated region
    $region46: #{tpu_custom_call.1} parent=1 // pred_check
      _
    $region47: #{tpu_custom_call.1} parent=1 // pred_check_branch
      %94 = sbr.rel (0) target = $region49
    $region48: #{tpu_custom_call.1} parent=1 // pred_region
      %95 = dma.done [#allocation12], 2048
    $region49: #{tpu_custom_call.1} parent=1 // pred_fallthru
      _
    %p96 = scmp.eq.s32.totalorder 0, 0
    // Predicated region
    $region50: #{tpu_custom_call.1} parent=1 // pred_check
      %p97 = pneg %p96
    $region51: #{tpu_custom_call.1} parent=1 // pred_check_branch
      %99 = sbr.rel (%p97) target = $region53
    $region52: #{tpu_custom_call.1} parent=1 // pred_region
      %v100 = vld [vmem:[#allocation8] sm:$0xff]
      %101 = vst [vmem:[#allocation2] sm:$0xff] %v100
    $region53: #{tpu_custom_call.1} parent=1 // pred_fallthru
      _
    %v102 = vld [vmem:[#allocation5] sm:$0xff]
    %v103 = vld [vmem:[#allocation5 + $0x8] sm:$0xff]
    %v104 = vld [vmem:[#allocation5 + $0x10] sm:$0xff]
    %v105 = vld [vmem:[#allocation5 + $0x18] sm:$0xff]
    %v106 = vld [vmem:[#allocation5 + $0x20] sm:$0xff]
    %v107 = vld [vmem:[#allocation5 + $0x28] sm:$0xff]
    %v108 = vld [vmem:[#allocation5 + $0x30] sm:$0xff]
    %v109 = vld [vmem:[#allocation5 + $0x38] sm:$0xff]
    %v110 = vld [vmem:[#allocation10] sm:$0xff]
    %v111 = vld [vmem:[#allocation10 + $0x8] sm:$0xff]
    %v112 = vld [vmem:[#allocation10 + $0x10] sm:$0xff]
    %v113 = vld [vmem:[#allocation10 + $0x18] sm:$0xff]
    %v114 = vld [vmem:[#allocation10 + $0x20] sm:$0xff]
    %v115 = vld [vmem:[#allocation10 + $0x28] sm:$0xff]
    %v116 = vld [vmem:[#allocation10 + $0x30] sm:$0xff]
    %v117 = vld [vmem:[#allocation10 + $0x38] sm:$0xff]
    %v118 = vld [vmem:[#allocation10 + $0x40] sm:$0xff]
    %v119 = vld [vmem:[#allocation10 + $0x48] sm:$0xff]
    %v120 = vld [vmem:[#allocation10 + $0x50] sm:$0xff]
    %v121 = vld [vmem:[#allocation10 + $0x58] sm:$0xff]
    %v122 = vld [vmem:[#allocation10 + $0x60] sm:$0xff]
    %v123 = vld [vmem:[#allocation10 + $0x68] sm:$0xff]
    %v124 = vld [vmem:[#allocation10 + $0x70] sm:$0xff]
    %v125 = vld [vmem:[#allocation10 + $0x78] sm:$0xff]
    %v126 = vld [vmem:[%s4] sm:$0x1]
    %v128 = vlaneseq
    %v129 = vshrl.u32 %v128, 7
    %v130 = vsub.s32 0, %v129
    %v131 = vrot.slane %v126, %v130
    %133 = vmatprep.subr.mxu0 0.0
    %134 = vmatpush1.msra.mxu0 %v125
    %135 = vmatprep.subr.mxu0 0.0
    %136 = vmatpush1.msra.mxu0 %v124
    %137 = vmatprep.subr.mxu0 0.0
    %138 = vmatpush1.msra.mxu0 %v123
    %139 = vmatprep.subr.mxu0 0.0
    %140 = vmatpush1.msra.mxu0 %v122
    %141 = vmatprep.subr.mxu0 0.0
    %142 = vmatpush1.msra.mxu0 %v121
    %143 = vmatprep.subr.mxu0 0.0
    %144 = vmatpush1.msra.mxu0 %v120
    %145 = vmatprep.subr.mxu0 0.0
    %146 = vmatpush1.msra.mxu0 %v119
    %147 = vmatprep.subr.mxu0 0.0
    %148 = vmatpush1.msra.mxu0 %v118
    %149 = vmatprep.subr.mxu0 0.0
    %150 = vmatpush1.msra.mxu0 %v117
    %151 = vmatprep.subr.mxu0 0.0
    %152 = vmatpush1.msra.mxu0 %v116
    %153 = vmatprep.subr.mxu0 0.0
    %154 = vmatpush1.msra.mxu0 %v115
    %155 = vmatprep.subr.mxu0 0.0
    %156 = vmatpush1.msra.mxu0 %v114
    %157 = vmatprep.subr.mxu0 0.0
    %158 = vmatpush1.msra.mxu0 %v113
    %159 = vmatprep.subr.mxu0 0.0
    %160 = vmatpush1.msra.mxu0 %v112
    %161 = vmatprep.subr.mxu0 0.0
    %162 = vmatpush1.msra.mxu0 %v111
    %163 = vmatprep.subr.mxu0 0.0
    %164 = vmatpush1.msra.mxu0 %v110
    %165 = vmatprep.subr.mxu0 0.0
    %166 = vmatpush2.msra.mxu0 0.0
    %167 = vmatprep.subr.mxu0 0.0
    %168 = vmatpush2.msra.mxu0 0.0
    %169 = vmatprep.subr.mxu0 0.0
    %170 = vmatpush2.msra.mxu0 0.0
    %171 = vmatprep.subr.mxu0 0.0
    %172 = vmatpush2.msra.mxu0 0.0
    %173 = vmatprep.subr.mxu0 0.0
    %174 = vmatpush2.msra.mxu0 0.0
    %175 = vmatprep.subr.mxu0 0.0
    %176 = vmatpush2.msra.mxu0 0.0
    %177 = vmatprep.subr.mxu0 0.0
    %178 = vmatpush2.msra.mxu0 0.0
    %179 = vmatprep.subr.mxu0 0.0
    %180 = vmatpush2.msra.mxu0 0.0
    %181 = vmatprep.subr.mxu0 0.0
    %182 = vmatpush2.msra.mxu0 0.0
    %183 = vmatprep.subr.mxu0 0.0
    %184 = vmatpush2.msra.mxu0 0.0
    %185 = vmatprep.subr.mxu0 0.0
    %186 = vmatpush2.msra.mxu0 0.0
    %187 = vmatprep.subr.mxu0 0.0
    %188 = vmatpush2.msra.mxu0 0.0
    %189 = vmatprep.subr.mxu0 0.0
    %190 = vmatpush2.msra.mxu0 0.0
    %191 = vmatprep.subr.mxu0 0.0
    %192 = vmatpush2.msra.mxu0 0.0
    %193 = vmatprep.subr.mxu0 0.0
    %194 = vmatpush2.msra.mxu0 0.0
    %195 = vmatprep.subr.mxu0 0.0
    %196 = vmatpush2.msra.mxu0 0.0
    %197 = vmatprep.mubr.f32.mxu0 0.0
    %198 = vmatmul.mubr.f32.gmra.mxu0 %v102
    %v199 = vpop.f32.mrf.mxu0
    %v200 = vadd.f32 %v131, %v199
    %v201 = vpop.f32.mrf.mxu0
    %202 = vmatprep.mubr.f32.mxu0 0.0
    %203 = vmatmul.mubr.f32.gmra.mxu0 %v103
    %v204 = vpop.f32.mrf.mxu0
    %v205 = vadd.f32 %v131, %v204
    %v206 = vpop.f32.mrf.mxu0
    %207 = vmatprep.mubr.f32.mxu0 0.0
    %208 = vmatmul.mubr.f32.gmra.mxu0 %v104
    %v209 = vpop.f32.mrf.mxu0
    %v210 = vadd.f32 %v131, %v209
    %v211 = vpop.f32.mrf.mxu0
    %212 = vmatprep.mubr.f32.mxu0 0.0
    %213 = vmatmul.mubr.f32.gmra.mxu0 %v105
    %v214 = vpop.f32.mrf.mxu0
    %v215 = vadd.f32 %v131, %v214
    %v216 = vpop.f32.mrf.mxu0
    %217 = vmatprep.mubr.f32.mxu0 0.0
    %218 = vmatmul.mubr.f32.gmra.mxu0 %v106
    %v219 = vpop.f32.mrf.mxu0
    %v220 = vadd.f32 %v131, %v219
    %v221 = vpop.f32.mrf.mxu0
    %222 = vmatprep.mubr.f32.mxu0 0.0
    %223 = vmatmul.mubr.f32.gmra.mxu0 %v107
    %v224 = vpop.f32.mrf.mxu0
    %v225 = vadd.f32 %v131, %v224
    %v226 = vpop.f32.mrf.mxu0
    %227 = vmatprep.mubr.f32.mxu0 0.0
    %228 = vmatmul.mubr.f32.gmra.mxu0 %v108
    %v229 = vpop.f32.mrf.mxu0
    %v230 = vadd.f32 %v131, %v229
    %v231 = vpop.f32.mrf.mxu0
    %232 = vmatprep.mubr.f32.mxu0 0.0
    %233 = vmatmul.mubr.f32.gmra.mxu0 %v109
    %v234 = vpop.f32.mrf.mxu0
    %v235 = vadd.f32 %v131, %v234
    %v236 = vpop.f32.mrf.mxu0
    %237 = vdwg.mxu0
    %238 = vst [vmem:[#allocation3] sm:$0xff] %v200
    %239 = vst [vmem:[#allocation3 + $0x8] sm:$0xff] %v205
    %240 = vst [vmem:[#allocation3 + $0x10] sm:$0xff] %v210
    %241 = vst [vmem:[#allocation3 + $0x18] sm:$0xff] %v215
    %242 = vst [vmem:[#allocation3 + $0x20] sm:$0xff] %v220
    %243 = vst [vmem:[#allocation3 + $0x28] sm:$0xff] %v225
    %244 = vst [vmem:[#allocation3 + $0x30] sm:$0xff] %v230
    %245 = vst [vmem:[#allocation3 + $0x38] sm:$0xff] %v235
    %v246 = vld [vmem:[#allocation11] sm:$0xff]
    %v247 = vld [vmem:[#allocation11 + $0x8] sm:$0xff]
    %v248 = vld [vmem:[#allocation11 + $0x10] sm:$0xff]
    %v249 = vld [vmem:[#allocation11 + $0x18] sm:$0xff]
    %v250 = vld [vmem:[#allocation11 + $0x20] sm:$0xff]
    %v251 = vld [vmem:[#allocation11 + $0x28] sm:$0xff]
    %v252 = vld [vmem:[#allocation11 + $0x30] sm:$0xff]
    %v253 = vld [vmem:[#allocation11 + $0x38] sm:$0xff]
    %v254 = vld [vmem:[#allocation11 + $0x40] sm:$0xff]
    %v255 = vld [vmem:[#allocation11 + $0x48] sm:$0xff]
    %v256 = vld [vmem:[#allocation11 + $0x50] sm:$0xff]
    %v257 = vld [vmem:[#allocation11 + $0x58] sm:$0xff]
    %v258 = vld [vmem:[#allocation11 + $0x60] sm:$0xff]
    %v259 = vld [vmem:[#allocation11 + $0x68] sm:$0xff]
    %v260 = vld [vmem:[#allocation11 + $0x70] sm:$0xff]
    %v261 = vld [vmem:[#allocation11 + $0x78] sm:$0xff]
    %v262 = vld [vmem:[#allocation2] sm:$0xff]
    %v263 = vld [vmem:[#allocation3] sm:$0xff]
    %264 = vmatprep.subr.mxu0 0.0
    %265 = vmatpush1.msra.mxu0 %v261
    %266 = vmatprep.subr.mxu0 0.0
    %267 = vmatpush1.msra.mxu0 %v260
    %268 = vmatprep.subr.mxu0 0.0
    %269 = vmatpush1.msra.mxu0 %v259
    %270 = vmatprep.subr.mxu0 0.0
    %271 = vmatpush1.msra.mxu0 %v258
    %272 = vmatprep.subr.mxu0 0.0
    %273 = vmatpush1.msra.mxu0 %v257
    %274 = vmatprep.subr.mxu0 0.0
    %275 = vmatpush1.msra.mxu0 %v256
    %276 = vmatprep.subr.mxu0 0.0
    %277 = vmatpush1.msra.mxu0 %v255
    %278 = vmatprep.subr.mxu0 0.0
    %279 = vmatpush1.msra.mxu0 %v254
    %280 = vmatprep.subr.mxu0 0.0
    %281 = vmatpush1.msra.mxu0 %v253
    %282 = vmatprep.subr.mxu0 0.0
    %283 = vmatpush1.msra.mxu0 %v252
    %284 = vmatprep.subr.mxu0 0.0
    %285 = vmatpush1.msra.mxu0 %v251
    %286 = vmatprep.subr.mxu0 0.0
    %287 = vmatpush1.msra.mxu0 %v250
    %288 = vmatprep.subr.mxu0 0.0
    %289 = vmatpush1.msra.mxu0 %v249
    %290 = vmatprep.subr.mxu0 0.0
    %291 = vmatpush1.msra.mxu0 %v248
    %292 = vmatprep.subr.mxu0 0.0
    %293 = vmatpush1.msra.mxu0 %v247
    %294 = vmatprep.subr.mxu0 0.0
    %295 = vmatpush1.msra.mxu0 %v246
    %296 = vmatprep.subr.mxu0 0.0
    %297 = vmatpush2.msra.mxu0 0.0
    %298 = vmatprep.subr.mxu0 0.0
    %299 = vmatpush2.msra.mxu0 0.0
    %300 = vmatprep.subr.mxu0 0.0
    %301 = vmatpush2.msra.mxu0 0.0
    %302 = vmatprep.subr.mxu0 0.0
    %303 = vmatpush2.msra.mxu0 0.0
    %304 = vmatprep.subr.mxu0 0.0
    %305 = vmatpush2.msra.mxu0 0.0
    %306 = vmatprep.subr.mxu0 0.0
    %307 = vmatpush2.msra.mxu0 0.0
    %308 = vmatprep.subr.mxu0 0.0
    %309 = vmatpush2.msra.mxu0 0.0
    %310 = vmatprep.subr.mxu0 0.0
    %311 = vmatpush2.msra.mxu0 0.0
    %312 = vmatprep.subr.mxu0 0.0
    %313 = vmatpush2.msra.mxu0 0.0
    %314 = vmatprep.subr.mxu0 0.0
    %315 = vmatpush2.msra.mxu0 0.0
    %316 = vmatprep.subr.mxu0 0.0
    %317 = vmatpush2.msra.mxu0 0.0
    %318 = vmatprep.subr.mxu0 0.0
    %319 = vmatpush2.msra.mxu0 0.0
    %320 = vmatprep.subr.mxu0 0.0
    %321 = vmatpush2.msra.mxu0 0.0
    %322 = vmatprep.subr.mxu0 0.0
    %323 = vmatpush2.msra.mxu0 0.0
    %324 = vmatprep.subr.mxu0 0.0
    %325 = vmatpush2.msra.mxu0 0.0
    %326 = vmatprep.subr.mxu0 0.0
    %327 = vmatpush2.msra.mxu0 0.0
    %328 = vmatprep.mubr.f32.mxu0 0.0
    %329 = vmatmul.mubr.f32.gmra.mxu0 %v262
    %v330 = vpop.f32.mrf.mxu0
    %v331 = vadd.f32 0.0, %v330
    %v332 = vpop.f32.mrf.mxu0
    %333 = vdwg.mxu0
    %v334 = vadd.f32 %v263, %v331
    %v335 = vtanh.pop %v334
    %336 = vst [vmem:[#allocation4] sm:$0xff] %v335
    %s337 = scalar_lea.vmem [#allocation3], 8
    %v338 = vld [vmem:[%s337] sm:$0xff]
    %339 = vmatprep.subr.mxu0 0.0
    %340 = vmatpush1.msra.mxu0 %v261
    %341 = vmatprep.subr.mxu0 0.0
    %342 = vmatpush1.msra.mxu0 %v260
    %343 = vmatprep.subr.mxu0 0.0
    %344 = vmatpush1.msra.mxu0 %v259
    %345 = vmatprep.subr.mxu0 0.0
    %346 = vmatpush1.msra.mxu0 %v258
    %347 = vmatprep.subr.mxu0 0.0
    %348 = vmatpush1.msra.mxu0 %v257
    %349 = vmatprep.subr.mxu0 0.0
    %350 = vmatpush1.msra.mxu0 %v256
    %351 = vmatprep.subr.mxu0 0.0
    %352 = vmatpush1.msra.mxu0 %v255
    %353 = vmatprep.subr.mxu0 0.0
    %354 = vmatpush1.msra.mxu0 %v254
    %355 = vmatprep.subr.mxu0 0.0
    %356 = vmatpush1.msra.mxu0 %v253
    %357 = vmatprep.subr.mxu0 0.0
    %358 = vmatpush1.msra.mxu0 %v252
    %359 = vmatprep.subr.mxu0 0.0
    %360 = vmatpush1.msra.mxu0 %v251
    %361 = vmatprep.subr.mxu0 0.0
    %362 = vmatpush1.msra.mxu0 %v250
    %363 = vmatprep.subr.mxu0 0.0
    %364 = vmatpush1.msra.mxu0 %v249
    %365 = vmatprep.subr.mxu0 0.0
    %366 = vmatpush1.msra.mxu0 %v248
    %367 = vmatprep.subr.mxu0 0.0
    %368 = vmatpush1.msra.mxu0 %v247
    %369 = vmatprep.subr.mxu0 0.0
    %370 = vmatpush1.msra.mxu0 %v246
    %371 = vmatprep.subr.mxu0 0.0
    %372 = vmatpush2.msra.mxu0 0.0
    %373 = vmatprep.subr.mxu0 0.0
    %374 = vmatpush2.msra.mxu0 0.0
    %375 = vmatprep.subr.mxu0 0.0
    %376 = vmatpush2.msra.mxu0 0.0
    %377 = vmatprep.subr.mxu0 0.0
    %378 = vmatpush2.msra.mxu0 0.0
    %379 = vmatprep.subr.mxu0 0.0
    %380 = vmatpush2.msra.mxu0 0.0
    %381 = vmatprep.subr.mxu0 0.0
    %382 = vmatpush2.msra.mxu0 0.0
    %383 = vmatprep.subr.mxu0 0.0
    %384 = vmatpush2.msra.mxu0 0.0
    %385 = vmatprep.subr.mxu0 0.0
    %386 = vmatpush2.msra.mxu0 0.0
    %387 = vmatprep.subr.mxu0 0.0
    %388 = vmatpush2.msra.mxu0 0.0
    %389 = vmatprep.subr.mxu0 0.0
    %390 = vmatpush2.msra.mxu0 0.0
    %391 = vmatprep.subr.mxu0 0.0
    %392 = vmatpush2.msra.mxu0 0.0
    %393 = vmatprep.subr.mxu0 0.0
    %394 = vmatpush2.msra.mxu0 0.0
    %395 = vmatprep.subr.mxu0 0.0
    %396 = vmatpush2.msra.mxu0 0.0
    %397 = vmatprep.subr.mxu0 0.0
    %398 = vmatpush2.msra.mxu0 0.0
    %399 = vmatprep.subr.mxu0 0.0
    %400 = vmatpush2.msra.mxu0 0.0
    %401 = vmatprep.subr.mxu0 0.0
    %402 = vmatpush2.msra.mxu0 0.0
    %403 = vmatprep.mubr.f32.mxu0 0.0
    %404 = vmatmul.mubr.f32.gmra.mxu0 %v335
    %v405 = vpop.f32.mrf.mxu0
    %v406 = vadd.f32 0.0, %v405
    %v407 = vpop.f32.mrf.mxu0
    %408 = vdwg.mxu0
    %v409 = vadd.f32 %v338, %v406
    %v410 = vtanh.pop %v409
    %s411 = scalar_lea.vmem [#allocation4], 8
    %412 = vst [vmem:[%s411] sm:$0xff] %v410
    %s413 = scalar_lea.vmem [#allocation3], 16
    %v414 = vld [vmem:[%s413] sm:$0xff]
    %415 = vmatprep.subr.mxu0 0.0
    %416 = vmatpush1.msra.mxu0 %v261
    %417 = vmatprep.subr.mxu0 0.0
    %418 = vmatpush1.msra.mxu0 %v260
    %419 = vmatprep.subr.mxu0 0.0
    %420 = vmatpush1.msra.mxu0 %v259
    %421 = vmatprep.subr.mxu0 0.0
    %422 = vmatpush1.msra.mxu0 %v258
    %423 = vmatprep.subr.mxu0 0.0
    %424 = vmatpush1.msra.mxu0 %v257
    %425 = vmatprep.subr.mxu0 0.0
    %426 = vmatpush1.msra.mxu0 %v256
    %427 = vmatprep.subr.mxu0 0.0
    %428 = vmatpush1.msra.mxu0 %v255
    %429 = vmatprep.subr.mxu0 0.0
    %430 = vmatpush1.msra.mxu0 %v254
    %431 = vmatprep.subr.mxu0 0.0
    %432 = vmatpush1.msra.mxu0 %v253
    %433 = vmatprep.subr.mxu0 0.0
    %434 = vmatpush1.msra.mxu0 %v252
    %435 = vmatprep.subr.mxu0 0.0
    %436 = vmatpush1.msra.mxu0 %v251
    %437 = vmatprep.subr.mxu0 0.0
    %438 = vmatpush1.msra.mxu0 %v250
    %439 = vmatprep.subr.mxu0 0.0
    %440 = vmatpush1.msra.mxu0 %v249
    %441 = vmatprep.subr.mxu0 0.0
    %442 = vmatpush1.msra.mxu0 %v248
    %443 = vmatprep.subr.mxu0 0.0
    %444 = vmatpush1.msra.mxu0 %v247
    %445 = vmatprep.subr.mxu0 0.0
    %446 = vmatpush1.msra.mxu0 %v246
    %447 = vmatprep.subr.mxu0 0.0
    %448 = vmatpush2.msra.mxu0 0.0
    %449 = vmatprep.subr.mxu0 0.0
    %450 = vmatpush2.msra.mxu0 0.0
    %451 = vmatprep.subr.mxu0 0.0
    %452 = vmatpush2.msra.mxu0 0.0
    %453 = vmatprep.subr.mxu0 0.0
    %454 = vmatpush2.msra.mxu0 0.0
    %455 = vmatprep.subr.mxu0 0.0
    %456 = vmatpush2.msra.mxu0 0.0
    %457 = vmatprep.subr.mxu0 0.0
    %458 = vmatpush2.msra.mxu0 0.0
    %459 = vmatprep.subr.mxu0 0.0
    %460 = vmatpush2.msra.mxu0 0.0
    %461 = vmatprep.subr.mxu0 0.0
    %462 = vmatpush2.msra.mxu0 0.0
    %463 = vmatprep.subr.mxu0 0.0
    %464 = vmatpush2.msra.mxu0 0.0
    %465 = vmatprep.subr.mxu0 0.0
    %466 = vmatpush2.msra.mxu0 0.0
    %467 = vmatprep.subr.mxu0 0.0
    %468 = vmatpush2.msra.mxu0 0.0
    %469 = vmatprep.subr.mxu0 0.0
    %470 = vmatpush2.msra.mxu0 0.0
    %471 = vmatprep.subr.mxu0 0.0
    %472 = vmatpush2.msra.mxu0 0.0
    %473 = vmatprep.subr.mxu0 0.0
    %474 = vmatpush2.msra.mxu0 0.0
    %475 = vmatprep.subr.mxu0 0.0
    %476 = vmatpush2.msra.mxu0 0.0
    %477 = vmatprep.subr.mxu0 0.0
    %478 = vmatpush2.msra.mxu0 0.0
    %479 = vmatprep.mubr.f32.mxu0 0.0
    %480 = vmatmul.mubr.f32.gmra.mxu0 %v410
    %v481 = vpop.f32.mrf.mxu0
    %v482 = vadd.f32 0.0, %v481
    %v483 = vpop.f32.mrf.mxu0
    %484 = vdwg.mxu0
    %v485 = vadd.f32 %v414, %v482
    %v486 = vtanh.pop %v485
    %s487 = scalar_lea.vmem [#allocation4], 16
    %488 = vst [vmem:[%s487] sm:$0xff] %v486
    %s489 = scalar_lea.vmem [#allocation3], 24
    %v490 = vld [vmem:[%s489] sm:$0xff]
    %491 = vmatprep.subr.mxu0 0.0
    %492 = vmatpush1.msra.mxu0 %v261
    %493 = vmatprep.subr.mxu0 0.0
    %494 = vmatpush1.msra.mxu0 %v260
    %495 = vmatprep.subr.mxu0 0.0
    %496 = vmatpush1.msra.mxu0 %v259
    %497 = vmatprep.subr.mxu0 0.0
    %498 = vmatpush1.msra.mxu0 %v258
    %499 = vmatprep.subr.mxu0 0.0
    %500 = vmatpush1.msra.mxu0 %v257
    %501 = vmatprep.subr.mxu0 0.0
    %502 = vmatpush1.msra.mxu0 %v256
    %503 = vmatprep.subr.mxu0 0.0
    %504 = vmatpush1.msra.mxu0 %v255
    %505 = vmatprep.subr.mxu0 0.0
    %506 = vmatpush1.msra.mxu0 %v254
    %507 = vmatprep.subr.mxu0 0.0
    %508 = vmatpush1.msra.mxu0 %v253
    %509 = vmatprep.subr.mxu0 0.0
    %510 = vmatpush1.msra.mxu0 %v252
    %511 = vmatprep.subr.mxu0 0.0
    %512 = vmatpush1.msra.mxu0 %v251
    %513 = vmatprep.subr.mxu0 0.0
    %514 = vmatpush1.msra.mxu0 %v250
    %515 = vmatprep.subr.mxu0 0.0
    %516 = vmatpush1.msra.mxu0 %v249
    %517 = vmatprep.subr.mxu0 0.0
    %518 = vmatpush1.msra.mxu0 %v248
    %519 = vmatprep.subr.mxu0 0.0
    %520 = vmatpush1.msra.mxu0 %v247
    %521 = vmatprep.subr.mxu0 0.0
    %522 = vmatpush1.msra.mxu0 %v246
    %523 = vmatprep.subr.mxu0 0.0
    %524 = vmatpush2.msra.mxu0 0.0
    %525 = vmatprep.subr.mxu0 0.0
    %526 = vmatpush2.msra.mxu0 0.0
    %527 = vmatprep.subr.mxu0 0.0
    %528 = vmatpush2.msra.mxu0 0.0
    %529 = vmatprep.subr.mxu0 0.0
    %530 = vmatpush2.msra.mxu0 0.0
    %531 = vmatprep.subr.mxu0 0.0
    %532 = vmatpush2.msra.mxu0 0.0
    %533 = vmatprep.subr.mxu0 0.0
    %534 = vmatpush2.msra.mxu0 0.0
    %535 = vmatprep.subr.mxu0 0.0
    %536 = vmatpush2.msra.mxu0 0.0
    %537 = vmatprep.subr.mxu0 0.0
    %538 = vmatpush2.msra.mxu0 0.0
    %539 = vmatprep.subr.mxu0 0.0
    %540 = vmatpush2.msra.mxu0 0.0
    %541 = vmatprep.subr.mxu0 0.0
    %542 = vmatpush2.msra.mxu0 0.0
    %543 = vmatprep.subr.mxu0 0.0
    %544 = vmatpush2.msra.mxu0 0.0
    %545 = vmatprep.subr.mxu0 0.0
    %546 = vmatpush2.msra.mxu0 0.0
    %547 = vmatprep.subr.mxu0 0.0
    %548 = vmatpush2.msra.mxu0 0.0
    %549 = vmatprep.subr.mxu0 0.0
    %550 = vmatpush2.msra.mxu0 0.0
    %551 = vmatprep.subr.mxu0 0.0
    %552 = vmatpush2.msra.mxu0 0.0
    %553 = vmatprep.subr.mxu0 0.0
    %554 = vmatpush2.msra.mxu0 0.0
    %555 = vmatprep.mubr.f32.mxu0 0.0
    %556 = vmatmul.mubr.f32.gmra.mxu0 %v486
    %v557 = vpop.f32.mrf.mxu0
    %v558 = vadd.f32 0.0, %v557
    %v559 = vpop.f32.mrf.mxu0
    %560 = vdwg.mxu0
    %v561 = vadd.f32 %v490, %v558
    %v562 = vtanh.pop %v561
    %s563 = scalar_lea.vmem [#allocation4], 24
    %564 = vst [vmem:[%s563] sm:$0xff] %v562
    %s565 = scalar_lea.vmem [#allocation3], 32
    %v566 = vld [vmem:[%s565] sm:$0xff]
    %567 = vmatprep.subr.mxu0 0.0
    %568 = vmatpush1.msra.mxu0 %v261
    %569 = vmatprep.subr.mxu0 0.0
    %570 = vmatpush1.msra.mxu0 %v260
    %571 = vmatprep.subr.mxu0 0.0
    %572 = vmatpush1.msra.mxu0 %v259
    %573 = vmatprep.subr.mxu0 0.0
    %574 = vmatpush1.msra.mxu0 %v258
    %575 = vmatprep.subr.mxu0 0.0
    %576 = vmatpush1.msra.mxu0 %v257
    %577 = vmatprep.subr.mxu0 0.0
    %578 = vmatpush1.msra.mxu0 %v256
    %579 = vmatprep.subr.mxu0 0.0
    %580 = vmatpush1.msra.mxu0 %v255
    %581 = vmatprep.subr.mxu0 0.0
    %582 = vmatpush1.msra.mxu0 %v254
    %583 = vmatprep.subr.mxu0 0.0
    %584 = vmatpush1.msra.mxu0 %v253
    %585 = vmatprep.subr.mxu0 0.0
    %586 = vmatpush1.msra.mxu0 %v252
    %587 = vmatprep.subr.mxu0 0.0
    %588 = vmatpush1.msra.mxu0 %v251
    %589 = vmatprep.subr.mxu0 0.0
    %590 = vmatpush1.msra.mxu0 %v250
    %591 = vmatprep.subr.mxu0 0.0
    %592 = vmatpush1.msra.mxu0 %v249
    %593 = vmatprep.subr.mxu0 0.0
    %594 = vmatpush1.msra.mxu0 %v248
    %595 = vmatprep.subr.mxu0 0.0
    %596 = vmatpush1.msra.mxu0 %v247
    %597 = vmatprep.subr.mxu0 0.0
    %598 = vmatpush1.msra.mxu0 %v246
    %599 = vmatprep.subr.mxu0 0.0
    %600 = vmatpush2.msra.mxu0 0.0
    %601 = vmatprep.subr.mxu0 0.0
    %602 = vmatpush2.msra.mxu0 0.0
    %603 = vmatprep.subr.mxu0 0.0
    %604 = vmatpush2.msra.mxu0 0.0
    %605 = vmatprep.subr.mxu0 0.0
    %606 = vmatpush2.msra.mxu0 0.0
    %607 = vmatprep.subr.mxu0 0.0
    %608 = vmatpush2.msra.mxu0 0.0
    %609 = vmatprep.subr.mxu0 0.0
    %610 = vmatpush2.msra.mxu0 0.0
    %611 = vmatprep.subr.mxu0 0.0
    %612 = vmatpush2.msra.mxu0 0.0
    %613 = vmatprep.subr.mxu0 0.0
    %614 = vmatpush2.msra.mxu0 0.0
    %615 = vmatprep.subr.mxu0 0.0
    %616 = vmatpush2.msra.mxu0 0.0
    %617 = vmatprep.subr.mxu0 0.0
    %618 = vmatpush2.msra.mxu0 0.0
    %619 = vmatprep.subr.mxu0 0.0
    %620 = vmatpush2.msra.mxu0 0.0
    %621 = vmatprep.subr.mxu0 0.0
    %622 = vmatpush2.msra.mxu0 0.0
    %623 = vmatprep.subr.mxu0 0.0
    %624 = vmatpush2.msra.mxu0 0.0
    %625 = vmatprep.subr.mxu0 0.0
    %626 = vmatpush2.msra.mxu0 0.0
    %627 = vmatprep.subr.mxu0 0.0
    %628 = vmatpush2.msra.mxu0 0.0
    %629 = vmatprep.subr.mxu0 0.0
    %630 = vmatpush2.msra.mxu0 0.0
    %631 = vmatprep.mubr.f32.mxu0 0.0
    %632 = vmatmul.mubr.f32.gmra.mxu0 %v562
    %v633 = vpop.f32.mrf.mxu0
    %v634 = vadd.f32 0.0, %v633
    %v635 = vpop.f32.mrf.mxu0
    %636 = vdwg.mxu0
    %v637 = vadd.f32 %v566, %v634
    %v638 = vtanh.pop %v637
    %s639 = scalar_lea.vmem [#allocation4], 32
    %640 = vst [vmem:[%s639] sm:$0xff] %v638
    %s641 = scalar_lea.vmem [#allocation3], 40
    %v642 = vld [vmem:[%s641] sm:$0xff]
    %643 = vmatprep.subr.mxu0 0.0
    %644 = vmatpush1.msra.mxu0 %v261
    %645 = vmatprep.subr.mxu0 0.0
    %646 = vmatpush1.msra.mxu0 %v260
    %647 = vmatprep.subr.mxu0 0.0
    %648 = vmatpush1.msra.mxu0 %v259
    %649 = vmatprep.subr.mxu0 0.0
    %650 = vmatpush1.msra.mxu0 %v258
    %651 = vmatprep.subr.mxu0 0.0
    %652 = vmatpush1.msra.mxu0 %v257
    %653 = vmatprep.subr.mxu0 0.0
    %654 = vmatpush1.msra.mxu0 %v256
    %655 = vmatprep.subr.mxu0 0.0
    %656 = vmatpush1.msra.mxu0 %v255
    %657 = vmatprep.subr.mxu0 0.0
    %658 = vmatpush1.msra.mxu0 %v254
    %659 = vmatprep.subr.mxu0 0.0
    %660 = vmatpush1.msra.mxu0 %v253
    %661 = vmatprep.subr.mxu0 0.0
    %662 = vmatpush1.msra.mxu0 %v252
    %663 = vmatprep.subr.mxu0 0.0
    %664 = vmatpush1.msra.mxu0 %v251
    %665 = vmatprep.subr.mxu0 0.0
    %666 = vmatpush1.msra.mxu0 %v250
    %667 = vmatprep.subr.mxu0 0.0
    %668 = vmatpush1.msra.mxu0 %v249
    %669 = vmatprep.subr.mxu0 0.0
    %670 = vmatpush1.msra.mxu0 %v248
    %671 = vmatprep.subr.mxu0 0.0
    %672 = vmatpush1.msra.mxu0 %v247
    %673 = vmatprep.subr.mxu0 0.0
    %674 = vmatpush1.msra.mxu0 %v246
    %675 = vmatprep.subr.mxu0 0.0
    %676 = vmatpush2.msra.mxu0 0.0
    %677 = vmatprep.subr.mxu0 0.0
    %678 = vmatpush2.msra.mxu0 0.0
    %679 = vmatprep.subr.mxu0 0.0
    %680 = vmatpush2.msra.mxu0 0.0
    %681 = vmatprep.subr.mxu0 0.0
    %682 = vmatpush2.msra.mxu0 0.0
    %683 = vmatprep.subr.mxu0 0.0
    %684 = vmatpush2.msra.mxu0 0.0
    %685 = vmatprep.subr.mxu0 0.0
    %686 = vmatpush2.msra.mxu0 0.0
    %687 = vmatprep.subr.mxu0 0.0
    %688 = vmatpush2.msra.mxu0 0.0
    %689 = vmatprep.subr.mxu0 0.0
    %690 = vmatpush2.msra.mxu0 0.0
    %691 = vmatprep.subr.mxu0 0.0
    %692 = vmatpush2.msra.mxu0 0.0
    %693 = vmatprep.subr.mxu0 0.0
    %694 = vmatpush2.msra.mxu0 0.0
    %695 = vmatprep.subr.mxu0 0.0
    %696 = vmatpush2.msra.mxu0 0.0
    %697 = vmatprep.subr.mxu0 0.0
    %698 = vmatpush2.msra.mxu0 0.0
    %699 = vmatprep.subr.mxu0 0.0
    %700 = vmatpush2.msra.mxu0 0.0
    %701 = vmatprep.subr.mxu0 0.0
    %702 = vmatpush2.msra.mxu0 0.0
    %703 = vmatprep.subr.mxu0 0.0
    %704 = vmatpush2.msra.mxu0 0.0
    %705 = vmatprep.subr.mxu0 0.0
    %706 = vmatpush2.msra.mxu0 0.0
    %707 = vmatprep.mubr.f32.mxu0 0.0
    %708 = vmatmul.mubr.f32.gmra.mxu0 %v638
    %v709 = vpop.f32.mrf.mxu0
    %v710 = vadd.f32 0.0, %v709
    %v711 = vpop.f32.mrf.mxu0
    %712 = vdwg.mxu0
    %v713 = vadd.f32 %v642, %v710
    %v714 = vtanh.pop %v713
    %s715 = scalar_lea.vmem [#allocation4], 40
    %716 = vst [vmem:[%s715] sm:$0xff] %v714
    %s717 = scalar_lea.vmem [#allocation3], 48
    %v718 = vld [vmem:[%s717] sm:$0xff]
    %719 = vmatprep.subr.mxu0 0.0
    %720 = vmatpush1.msra.mxu0 %v261
    %721 = vmatprep.subr.mxu0 0.0
    %722 = vmatpush1.msra.mxu0 %v260
    %723 = vmatprep.subr.mxu0 0.0
    %724 = vmatpush1.msra.mxu0 %v259
    %725 = vmatprep.subr.mxu0 0.0
    %726 = vmatpush1.msra.mxu0 %v258
    %727 = vmatprep.subr.mxu0 0.0
    %728 = vmatpush1.msra.mxu0 %v257
    %729 = vmatprep.subr.mxu0 0.0
    %730 = vmatpush1.msra.mxu0 %v256
    %731 = vmatprep.subr.mxu0 0.0
    %732 = vmatpush1.msra.mxu0 %v255
    %733 = vmatprep.subr.mxu0 0.0
    %734 = vmatpush1.msra.mxu0 %v254
    %735 = vmatprep.subr.mxu0 0.0
    %736 = vmatpush1.msra.mxu0 %v253
    %737 = vmatprep.subr.mxu0 0.0
    %738 = vmatpush1.msra.mxu0 %v252
    %739 = vmatprep.subr.mxu0 0.0
    %740 = vmatpush1.msra.mxu0 %v251
    %741 = vmatprep.subr.mxu0 0.0
    %742 = vmatpush1.msra.mxu0 %v250
    %743 = vmatprep.subr.mxu0 0.0
    %744 = vmatpush1.msra.mxu0 %v249
    %745 = vmatprep.subr.mxu0 0.0
    %746 = vmatpush1.msra.mxu0 %v248
    %747 = vmatprep.subr.mxu0 0.0
    %748 = vmatpush1.msra.mxu0 %v247
    %749 = vmatprep.subr.mxu0 0.0
    %750 = vmatpush1.msra.mxu0 %v246
    %751 = vmatprep.subr.mxu0 0.0
    %752 = vmatpush2.msra.mxu0 0.0
    %753 = vmatprep.subr.mxu0 0.0
    %754 = vmatpush2.msra.mxu0 0.0
    %755 = vmatprep.subr.mxu0 0.0
    %756 = vmatpush2.msra.mxu0 0.0
    %757 = vmatprep.subr.mxu0 0.0
    %758 = vmatpush2.msra.mxu0 0.0
    %759 = vmatprep.subr.mxu0 0.0
    %760 = vmatpush2.msra.mxu0 0.0
    %761 = vmatprep.subr.mxu0 0.0
    %762 = vmatpush2.msra.mxu0 0.0
    %763 = vmatprep.subr.mxu0 0.0
    %764 = vmatpush2.msra.mxu0 0.0
    %765 = vmatprep.subr.mxu0 0.0
    %766 = vmatpush2.msra.mxu0 0.0
    %767 = vmatprep.subr.mxu0 0.0
    %768 = vmatpush2.msra.mxu0 0.0
    %769 = vmatprep.subr.mxu0 0.0
    %770 = vmatpush2.msra.mxu0 0.0
    %771 = vmatprep.subr.mxu0 0.0
    %772 = vmatpush2.msra.mxu0 0.0
    %773 = vmatprep.subr.mxu0 0.0
    %774 = vmatpush2.msra.mxu0 0.0
    %775 = vmatprep.subr.mxu0 0.0
    %776 = vmatpush2.msra.mxu0 0.0
    %777 = vmatprep.subr.mxu0 0.0
    %778 = vmatpush2.msra.mxu0 0.0
    %779 = vmatprep.subr.mxu0 0.0
    %780 = vmatpush2.msra.mxu0 0.0
    %781 = vmatprep.subr.mxu0 0.0
    %782 = vmatpush2.msra.mxu0 0.0
    %783 = vmatprep.mubr.f32.mxu0 0.0
    %784 = vmatmul.mubr.f32.gmra.mxu0 %v714
    %v785 = vpop.f32.mrf.mxu0
    %v786 = vadd.f32 0.0, %v785
    %v787 = vpop.f32.mrf.mxu0
    %788 = vdwg.mxu0
    %v789 = vadd.f32 %v718, %v786
    %v790 = vtanh.pop %v789
    %s791 = scalar_lea.vmem [#allocation4], 48
    %792 = vst [vmem:[%s791] sm:$0xff] %v790
    %s793 = scalar_lea.vmem [#allocation3], 56
    %v794 = vld [vmem:[%s793] sm:$0xff]
    %795 = vmatprep.subr.mxu0 0.0
    %796 = vmatpush1.msra.mxu0 %v261
    %797 = vmatprep.subr.mxu0 0.0
    %798 = vmatpush1.msra.mxu0 %v260
    %799 = vmatprep.subr.mxu0 0.0
    %800 = vmatpush1.msra.mxu0 %v259
    %801 = vmatprep.subr.mxu0 0.0
    %802 = vmatpush1.msra.mxu0 %v258
    %803 = vmatprep.subr.mxu0 0.0
    %804 = vmatpush1.msra.mxu0 %v257
    %805 = vmatprep.subr.mxu0 0.0
    %806 = vmatpush1.msra.mxu0 %v256
    %807 = vmatprep.subr.mxu0 0.0
    %808 = vmatpush1.msra.mxu0 %v255
    %809 = vmatprep.subr.mxu0 0.0
    %810 = vmatpush1.msra.mxu0 %v254
    %811 = vmatprep.subr.mxu0 0.0
    %812 = vmatpush1.msra.mxu0 %v253
    %813 = vmatprep.subr.mxu0 0.0
    %814 = vmatpush1.msra.mxu0 %v252
    %815 = vmatprep.subr.mxu0 0.0
    %816 = vmatpush1.msra.mxu0 %v251
    %817 = vmatprep.subr.mxu0 0.0
    %818 = vmatpush1.msra.mxu0 %v250
    %819 = vmatprep.subr.mxu0 0.0
    %820 = vmatpush1.msra.mxu0 %v249
    %821 = vmatprep.subr.mxu0 0.0
    %822 = vmatpush1.msra.mxu0 %v248
    %823 = vmatprep.subr.mxu0 0.0
    %824 = vmatpush1.msra.mxu0 %v247
    %825 = vmatprep.subr.mxu0 0.0
    %826 = vmatpush1.msra.mxu0 %v246
    %827 = vmatprep.subr.mxu0 0.0
    %828 = vmatpush2.msra.mxu0 0.0
    %829 = vmatprep.subr.mxu0 0.0
    %830 = vmatpush2.msra.mxu0 0.0
    %831 = vmatprep.subr.mxu0 0.0
    %832 = vmatpush2.msra.mxu0 0.0
    %833 = vmatprep.subr.mxu0 0.0
    %834 = vmatpush2.msra.mxu0 0.0
    %835 = vmatprep.subr.mxu0 0.0
    %836 = vmatpush2.msra.mxu0 0.0
    %837 = vmatprep.subr.mxu0 0.0
    %838 = vmatpush2.msra.mxu0 0.0
    %839 = vmatprep.subr.mxu0 0.0
    %840 = vmatpush2.msra.mxu0 0.0
    %841 = vmatprep.subr.mxu0 0.0
    %842 = vmatpush2.msra.mxu0 0.0
    %843 = vmatprep.subr.mxu0 0.0
    %844 = vmatpush2.msra.mxu0 0.0
    %845 = vmatprep.subr.mxu0 0.0
    %846 = vmatpush2.msra.mxu0 0.0
    %847 = vmatprep.subr.mxu0 0.0
    %848 = vmatpush2.msra.mxu0 0.0
    %849 = vmatprep.subr.mxu0 0.0
    %850 = vmatpush2.msra.mxu0 0.0
    %851 = vmatprep.subr.mxu0 0.0
    %852 = vmatpush2.msra.mxu0 0.0
    %853 = vmatprep.subr.mxu0 0.0
    %854 = vmatpush2.msra.mxu0 0.0
    %855 = vmatprep.subr.mxu0 0.0
    %856 = vmatpush2.msra.mxu0 0.0
    %857 = vmatprep.subr.mxu0 0.0
    %858 = vmatpush2.msra.mxu0 0.0
    %859 = vmatprep.mubr.f32.mxu0 0.0
    %860 = vmatmul.mubr.f32.gmra.mxu0 %v790
    %v861 = vpop.f32.mrf.mxu0
    %v862 = vadd.f32 0.0, %v861
    %v863 = vpop.f32.mrf.mxu0
    %864 = vdwg.mxu0
    %v865 = vadd.f32 %v794, %v862
    %v866 = vtanh.pop %v865
    %s867 = scalar_lea.vmem [#allocation4], 56
    %868 = vst [vmem:[%s867] sm:$0xff] %v866
    %869 = vst [vmem:[#allocation2] sm:$0xff] %v866
    %v870 = vld [vmem:[#allocation4] sm:$0xff]
    %v871 = vld [vmem:[#allocation4 + $0x8] sm:$0xff]
    %v872 = vld [vmem:[#allocation4 + $0x10] sm:$0xff]
    %v873 = vld [vmem:[#allocation4 + $0x18] sm:$0xff]
    %v874 = vld [vmem:[#allocation4 + $0x20] sm:$0xff]
    %v875 = vld [vmem:[#allocation4 + $0x28] sm:$0xff]
    %v876 = vld [vmem:[#allocation4 + $0x30] sm:$0xff]
    %v877 = vld [vmem:[#allocation4 + $0x38] sm:$0xff]
    %v878 = vld [vmem:[#allocation13] sm:$0xff]
    %v879 = vld [vmem:[#allocation13 + $0x8] sm:$0xff]
    %v880 = vld [vmem:[#allocation13 + $0x10] sm:$0xff]
    %v881 = vld [vmem:[#allocation13 + $0x18] sm:$0xff]
    %v882 = vld [vmem:[#allocation13 + $0x20] sm:$0xff]
    %v883 = vld [vmem:[#allocation13 + $0x28] sm:$0xff]
    %v884 = vld [vmem:[#allocation13 + $0x30] sm:$0xff]
    %v885 = vld [vmem:[#allocation13 + $0x38] sm:$0xff]
    %v886 = vld [vmem:[#allocation13 + $0x40] sm:$0xff]
    %v887 = vld [vmem:[#allocation13 + $0x48] sm:$0xff]
    %v888 = vld [vmem:[#allocation13 + $0x50] sm:$0xff]
    %v889 = vld [vmem:[#allocation13 + $0x58] sm:$0xff]
    %v890 = vld [vmem:[#allocation13 + $0x60] sm:$0xff]
    %v891 = vld [vmem:[#allocation13 + $0x68] sm:$0xff]
    %v892 = vld [vmem:[#allocation13 + $0x70] sm:$0xff]
    %v893 = vld [vmem:[#allocation13 + $0x78] sm:$0xff]
    %v894 = vld [vmem:[%s6] sm:$0x1]
    %v896 = vlaneseq
    %v897 = vshrl.u32 %v896, 7
    %v898 = vsub.s32 0, %v897
    %v899 = vrot.slane %v894, %v898
    %901 = vmatprep.subr.mxu0 0.0
    %902 = vmatpush1.msra.mxu0 %v893
    %903 = vmatprep.subr.mxu0 0.0
    %904 = vmatpush1.msra.mxu0 %v892
    %905 = vmatprep.subr.mxu0 0.0
    %906 = vmatpush1.msra.mxu0 %v891
    %907 = vmatprep.subr.mxu0 0.0
    %908 = vmatpush1.msra.mxu0 %v890
    %909 = vmatprep.subr.mxu0 0.0
    %910 = vmatpush1.msra.mxu0 %v889
    %911 = vmatprep.subr.mxu0 0.0
    %912 = vmatpush1.msra.mxu0 %v888
    %913 = vmatprep.subr.mxu0 0.0
    %914 = vmatpush1.msra.mxu0 %v887
    %915 = vmatprep.subr.mxu0 0.0
    %916 = vmatpush1.msra.mxu0 %v886
    %917 = vmatprep.subr.mxu0 0.0
    %918 = vmatpush1.msra.mxu0 %v885
    %919 = vmatprep.subr.mxu0 0.0
    %920 = vmatpush1.msra.mxu0 %v884
    %921 = vmatprep.subr.mxu0 0.0
    %922 = vmatpush1.msra.mxu0 %v883
    %923 = vmatprep.subr.mxu0 0.0
    %924 = vmatpush1.msra.mxu0 %v882
    %925 = vmatprep.subr.mxu0 0.0
    %926 = vmatpush1.msra.mxu0 %v881
    %927 = vmatprep.subr.mxu0 0.0
    %928 = vmatpush1.msra.mxu0 %v880
    %929 = vmatprep.subr.mxu0 0.0
    %930 = vmatpush1.msra.mxu0 %v879
    %931 = vmatprep.subr.mxu0 0.0
    %932 = vmatpush1.msra.mxu0 %v878
    %933 = vmatprep.subr.mxu0 0.0
    %934 = vmatpush2.msra.mxu0 0.0
    %935 = vmatprep.subr.mxu0 0.0
    %936 = vmatpush2.msra.mxu0 0.0
    %937 = vmatprep.subr.mxu0 0.0
    %938 = vmatpush2.msra.mxu0 0.0
    %939 = vmatprep.subr.mxu0 0.0
    %940 = vmatpush2.msra.mxu0 0.0
    %941 = vmatprep.subr.mxu0 0.0
    %942 = vmatpush2.msra.mxu0 0.0
    %943 = vmatprep.subr.mxu0 0.0
    %944 = vmatpush2.msra.mxu0 0.0
    %945 = vmatprep.subr.mxu0 0.0
    %946 = vmatpush2.msra.mxu0 0.0
    %947 = vmatprep.subr.mxu0 0.0
    %948 = vmatpush2.msra.mxu0 0.0
    %949 = vmatprep.subr.mxu0 0.0
    %950 = vmatpush2.msra.mxu0 0.0
    %951 = vmatprep.subr.mxu0 0.0
    %952 = vmatpush2.msra.mxu0 0.0
    %953 = vmatprep.subr.mxu0 0.0
    %954 = vmatpush2.msra.mxu0 0.0
    %955 = vmatprep.subr.mxu0 0.0
    %956 = vmatpush2.msra.mxu0 0.0
    %957 = vmatprep.subr.mxu0 0.0
    %958 = vmatpush2.msra.mxu0 0.0
    %959 = vmatprep.subr.mxu0 0.0
    %960 = vmatpush2.msra.mxu0 0.0
    %961 = vmatprep.subr.mxu0 0.0
    %962 = vmatpush2.msra.mxu0 0.0
    %963 = vmatprep.subr.mxu0 0.0
    %964 = vmatpush2.msra.mxu0 0.0
    %965 = vmatprep.mubr.f32.mxu0 0.0
    %966 = vmatmul.mubr.f32.gmra.mxu0 %v870
    %v967 = vpop.f32.mrf.mxu0
    %v968 = vadd.f32 %v899, %v967
    %v969 = vpop.f32.mrf.mxu0
    %970 = vmatprep.mubr.f32.mxu0 0.0
    %971 = vmatmul.mubr.f32.gmra.mxu0 %v871
    %v972 = vpop.f32.mrf.mxu0
    %v973 = vadd.f32 %v899, %v972
    %v974 = vpop.f32.mrf.mxu0
    %975 = vmatprep.mubr.f32.mxu0 0.0
    %976 = vmatmul.mubr.f32.gmra.mxu0 %v872
    %v977 = vpop.f32.mrf.mxu0
    %v978 = vadd.f32 %v899, %v977
    %v979 = vpop.f32.mrf.mxu0
    %980 = vmatprep.mubr.f32.mxu0 0.0
    %981 = vmatmul.mubr.f32.gmra.mxu0 %v873
    %v982 = vpop.f32.mrf.mxu0
    %v983 = vadd.f32 %v899, %v982
    %v984 = vpop.f32.mrf.mxu0
    %985 = vmatprep.mubr.f32.mxu0 0.0
    %986 = vmatmul.mubr.f32.gmra.mxu0 %v874
    %v987 = vpop.f32.mrf.mxu0
    %v988 = vadd.f32 %v899, %v987
    %v989 = vpop.f32.mrf.mxu0
    %990 = vmatprep.mubr.f32.mxu0 0.0
    %991 = vmatmul.mubr.f32.gmra.mxu0 %v875
    %v992 = vpop.f32.mrf.mxu0
    %v993 = vadd.f32 %v899, %v992
    %v994 = vpop.f32.mrf.mxu0
    %995 = vmatprep.mubr.f32.mxu0 0.0
    %996 = vmatmul.mubr.f32.gmra.mxu0 %v876
    %v997 = vpop.f32.mrf.mxu0
    %v998 = vadd.f32 %v899, %v997
    %v999 = vpop.f32.mrf.mxu0
    %1000 = vmatprep.mubr.f32.mxu0 0.0
    %1001 = vmatmul.mubr.f32.gmra.mxu0 %v877
    %v1002 = vpop.f32.mrf.mxu0
    %v1003 = vadd.f32 %v899, %v1002
    %v1004 = vpop.f32.mrf.mxu0
    %1005 = vdwg.mxu0
    %1006 = vst [vmem:[#allocation14] sm:$0xff] %v968
    %1007 = vst [vmem:[#allocation14 + $0x8] sm:$0xff] %v973
    %1008 = vst [vmem:[#allocation14 + $0x10] sm:$0xff] %v978
    %1009 = vst [vmem:[#allocation14 + $0x18] sm:$0xff] %v983
    %1010 = vst [vmem:[#allocation14 + $0x20] sm:$0xff] %v988
    %1011 = vst [vmem:[#allocation14 + $0x28] sm:$0xff] %v993
    %1012 = vst [vmem:[#allocation14 + $0x30] sm:$0xff] %v998
    %1013 = vst [vmem:[#allocation14 + $0x38] sm:$0xff] %v1003
    // Predicated region
    $region54: #{tpu_custom_call.1} parent=1 // pred_check
      %p1014 = pneg %p96
    $region55: #{tpu_custom_call.1} parent=1 // pred_check_branch
      %1016 = sbr.rel (%p1014) target = $region57
    $region56: #{tpu_custom_call.1} parent=1 // pred_region
      %1017 = vst [vmem:[#allocation15] sm:$0xff] %v866
    $region57: #{tpu_custom_call.1} parent=1 // pred_fallthru
      _
    // Predicated region
    $region58: #{tpu_custom_call.1} parent=1 // pred_check
      _
    $region59: #{tpu_custom_call.1} parent=1 // pred_check_branch
      %1019 = sbr.rel (0) target = $region61
    $region60: #{tpu_custom_call.1} parent=1 // pred_region
      %s1021 = ssub.s32 1024, 1024
      %1022 = vsyncadd [#allocation7], %s1021
      %s1023 = sshll.u32 [#allocation14], 4
      %s1024 = int_to_ptr.vmem [resolvable:$true] %s1023
      %1029 = dma.vmem_to_hbm [thread:$0]  %s1024, 1024, %s7, [#allocation7], 128, 128, 8
    $region61: #{tpu_custom_call.1} parent=1 // pred_fallthru
      _
    // Predicated region
    $region62: #{tpu_custom_call.1} parent=1 // pred_check
      _
    $region63: #{tpu_custom_call.1} parent=1 // pred_check_branch
      %1031 = sbr.rel (0) target = $region65
    $region64: #{tpu_custom_call.1} parent=1 // pred_region
      %s1033 = ssub.s32 128, 128
      %1034 = vsyncadd [#allocation16], %s1033
      %s1036 = sshll.u32 [#allocation15], 4
      %s1037 = int_to_ptr.vmem [resolvable:$true] %s1036
      %1039 = dma.vmem_to_hbm [thread:$0]  %s1037, 128, %s8, [#allocation16]
    $region65: #{tpu_custom_call.1} parent=1 // pred_fallthru
      _
    // Predicated region
    $region66: #{tpu_custom_call.1} parent=1 // pred_check
      _
    $region67: #{tpu_custom_call.1} parent=1 // pred_check_branch
      %1041 = sbr.rel (0) target = $region69
    $region68: #{tpu_custom_call.1} parent=1 // pred_region
      %1042 = dma.done [#allocation7], 1024
    $region69: #{tpu_custom_call.1} parent=1 // pred_fallthru
      _
    // Predicated region
    $region70: #{tpu_custom_call.1} parent=1 // pred_check
      _
    $region71: #{tpu_custom_call.1} parent=1 // pred_check_branch
      %1044 = sbr.rel (0) target = $region73
    $region72: #{tpu_custom_call.1} parent=1 // pred_region
      %1045 = dma.done [#allocation16], 128
    $region73: #{tpu_custom_call.1} parent=1 // pred_fallthru
      _
    %1046 = vsyncpa [#allocation6], 1
    %1047 = vsyncpa [#allocation9], 1
    %1048 = vsyncpa [#allocation12], 1
    %1049 = vsyncpa [#allocation7], 1
    %1050 = vsyncpa [#allocation16], 1

</llo_original>
